<compile_context>
chip_gen: v5e
topology: v5e:2x2
jax: 0.10.0
libtpu: 0.0.40
codegen_flags: <defaults>
</compile_context>

<pallas_src>
from itertools import accumulate

import jax
import jax.numpy as jnp
from jax.experimental import pallas as pl
from jax.experimental.pallas import tpu as pltpu


def _cos_kernel(emb_ref, w_ref, inv_wn_ref, cos_ref):
    """One (TB, TC) output tile: bf16 MXU matmul, f32 column-scale + clip epilogue."""
    # emb_ref: (TB, D) bf16 row-normalized embeddings
    # w_ref:   (D, TC) bf16 raw (un-normalized) weight tile
    # inv_wn:  (1, TC) f32 per-column 1/||w||
    cos = jnp.dot(emb_ref[...], w_ref[...], preferred_element_type=jnp.float32)
    cos = cos * inv_wn_ref[...]                       # fold column norm into epilogue
    cos_ref[...] = jnp.clip(cos, -1.0, 1.0).astype(cos_ref.dtype)


def _pick_tile(n, candidates):
    """Largest candidate tile that evenly divides n; fall back to the full dim
    (block == full array is always a legal TPU block shape)."""
    for t in candidates:
        if n % t == 0:
            return t
    return n


class CommonFacePallas:
    """JAX/Pallas port of CommonFace head (logit computation path)."""

    def __init__(self, in_features, gpu_index, weight_init, class_split):
        self.in_features = in_features
        self.gpu_index = gpu_index
        self.out_features = class_split[gpu_index]
        self.shard_start_list = [0] + list(accumulate(class_split))
        lo = self.shard_start_list[gpu_index]
        hi = self.shard_start_list[gpu_index + 1]
        self.shard_lo = lo
        self.shard_hi = hi

        # parameter: slice of the global weight_init (D, total_classes)
        self.kernel = jnp.asarray(weight_init[:, lo:hi], dtype=jnp.float32)   # (D, C)
        # Precompute per-column 1/||w|| and a bf16 copy for the MXU feed.
        # (For training these would be refreshed each optimizer step; forward-only here.)
        w2 = jnp.sum(self.kernel * self.kernel, axis=0, keepdims=True)        # (1, C)
        self.inv_wnorm = jax.lax.rsqrt(w2)                                    # (1, C) f32
        self.kernel_bf16 = self.kernel.astype(jnp.bfloat16)                   # (D, C)

    def calc_logits(self, embeddings, labels):
        B, D = embeddings.shape
        C = self.kernel.shape[1]

        # ---- row-normalize embeddings in the wrapper (B x D is tiny), bf16 MXU feed
        emb = embeddings.astype(jnp.float32)
        emb_n = emb * jax.lax.rsqrt(jnp.sum(emb * emb, axis=1, keepdims=True))
        emb_n = emb_n.astype(jnp.bfloat16)

        # ---- tile sizes: MXU/lane-friendly multiples, full-dim fallback for tiny shapes
        TB = _pick_tile(B, (256, 128, 64, 32, 16, 8))        # sublane: multiple of 8
        TC = _pick_tile(C, (4096, 2048, 1024, 512, 256, 128))  # lane: multiple of 128
        grid = (B // TB, C // TC)

        cos_theta = pl.pallas_call(
            _cos_kernel,
            out_shape=jax.ShapeDtypeStruct((B, C), jnp.float32),
            grid=grid,
            in_specs=[
                pl.BlockSpec((TB, D), lambda i, j: (i, 0)),   # emb_n tile, reused over j
                pl.BlockSpec((D, TC), lambda i, j: (0, j)),   # weight tile streams over C
                pl.BlockSpec((1, TC), lambda i, j: (0, j)),   # per-column inv norm
            ],
            out_specs=pl.BlockSpec((TB, TC), lambda i, j: (i, j)),
            compiler_params=pltpu.CompilerParams(
                dimension_semantics=("parallel", "parallel"),
                vmem_limit_bytes=96 * 1024 * 1024,
            ),
        )(emb_n, self.kernel_bf16, self.inv_wnorm)

        # ---- part labels / validity mask: elementwise on B int32s -> plain JAX
        labels1d = labels.reshape(-1).astype(jnp.int32)
        in_shard = (labels1d >= self.shard_lo) & (labels1d < self.shard_hi)
        part_labels = jnp.where(in_shard, labels1d - self.shard_lo, -1)

        original_logits = cos_theta          # detached clone == same values
        valid_mask = part_labels != -1       # stand-in for torch.where(...)[0]
        return valid_mask, part_labels, cos_theta, original_logits


def _reference(embeddings, kernel, labels, lo, hi):
    emb_n = embeddings / jnp.linalg.norm(embeddings, axis=1, keepdims=True)
    w_n = kernel / jnp.linalg.norm(kernel, axis=0, keepdims=True)
    cos = jnp.clip(emb_n @ w_n, -1.0, 1.0)
    mask = (labels >= lo) & (labels < hi)
    part = jnp.where(mask, labels - lo, -1)
    return cos, part


if __name__ == "__main__":
    key = jax.random.PRNGKey(0)
    k1, k2, k3 = jax.random.split(key, 3)

    B = 8                   # batch
    D = 32                  # in_features
    class_split = [16, 16]  # total 32 classes split over 2 "gpus"
    gpu_index = 0

    weight_init = jax.random.normal(k1, (D, sum(class_split)), dtype=jnp.float32)
    embeddings = jax.random.normal(k2, (B, D), dtype=jnp.float32)
    labels = jax.random.randint(k3, (B,), 0, sum(class_split), dtype=jnp.int32)

    head = CommonFacePallas(D, gpu_index, weight_init, class_split)
    valid_mask, part_labels, cos_theta, original_logits = head.calc_logits(
        embeddings, labels)
    jax.block_until_ready((valid_mask, part_labels, cos_theta, original_logits))

    # sanity check against a pure-JAX f32 reference (bf16 MXU feed -> looser tol)
    ref_cos, ref_part = _reference(embeddings, head.kernel, labels,
                                   head.shard_lo, head.shard_hi)
    assert jnp.allclose(cos_theta, ref_cos, atol=2e-2, rtol=2e-2)
    assert jnp.array_equal(part_labels, ref_part)
    assert jnp.array_equal(original_logits, cos_theta)

    print("KERNEL_OK")
</pallas_src>

<mosaic_0001>
module attributes {stable_mosaic.version = 11 : i64} {
  func.func @_cos_kernel(%arg0: i32, %arg1: i32, %arg2: memref<8x32xbf16, #tpu.memory_space<vmem>>, %arg3: memref<32x16xbf16, #tpu.memory_space<vmem>>, %arg4: memref<1x16xf32, #tpu.memory_space<vmem>>, %arg5: memref<8x16xf32, #tpu.memory_space<vmem>>) attributes {dimension_semantics = [#tpu.dimension_semantics<parallel>, #tpu.dimension_semantics<parallel>], iteration_bounds = array<i64: 1, 1>, scalar_prefetch = 0 : i64, scratch_operands = 0 : i64, tpu.core_type = #tpu.core_type<tc>, window_params = [{transform_indices = @transform_0, window_bounds = array<i64: 8, 32>}, {transform_indices = @transform_1, window_bounds = array<i64: 32, 16>}, {transform_indices = @transform_2, window_bounds = array<i64: 1, 16>}, {transform_indices = @transform_3, window_bounds = array<i64: 8, 16>}]} {
    %c0 = arith.constant 0 : index
    %c0_0 = arith.constant 0 : index
    %0 = vector.load %arg2[%c0, %c0_0] : memref<8x32xbf16, #tpu.memory_space<vmem>>, vector<8x32xbf16>
    %c0_1 = arith.constant 0 : index
    %c0_2 = arith.constant 0 : index
    %1 = vector.load %arg3[%c0_1, %c0_2] : memref<32x16xbf16, #tpu.memory_space<vmem>>, vector<32x16xbf16>
    %cst = arith.constant dense<0.000000e+00> : vector<8x16xf32>
    %2 = tpu.matmul %0, %1, %cst {dimension_numbers = #tpu.dot_dimension_numbers<[1], [0], [0], [1], [0, 0, 1, 1], [], []>} : vector<8x32xbf16>, vector<32x16xbf16>, vector<8x16xf32> -> vector<8x16xf32>
    %c0_3 = arith.constant 0 : index
    %c0_4 = arith.constant 0 : index
    %3 = vector.load %arg4[%c0_3, %c0_4] : memref<1x16xf32, #tpu.memory_space<vmem>>, vector<1x16xf32>
    %4 = vector.broadcast %3 : vector<1x16xf32> to vector<8x16xf32>
    %5 = arith.mulf %2, %4 : vector<8x16xf32>
    %cst_5 = arith.constant -1.000000e+00 : f32
    %cst_6 = arith.constant 1.000000e+00 : f32
    %6 = vector.broadcast %cst_5 : f32 to vector<8x16xf32>
    %7 = arith.maximumf %6, %5 : vector<8x16xf32>
    %8 = vector.broadcast %cst_6 : f32 to vector<8x16xf32>
    %9 = arith.minimumf %8, %7 : vector<8x16xf32>
    %c0_7 = arith.constant 0 : index
    %c0_8 = arith.constant 0 : index
    %10 = vector.load %arg5[%c0_7, %c0_8] : memref<8x16xf32, #tpu.memory_space<vmem>>, vector<8x16xf32>
    tpu.vector_store %arg5[%c0_7, %c0_8], %9 {strides = array<i32>} : memref<8x16xf32, #tpu.memory_space<vmem>>, vector<8x16xf32>,
    return
  }
  func.func @transform_0(%arg0: i32, %arg1: i32) -> (i32, i32) {
    %c0_i32 = arith.constant 0 : i32
    %c0_i32_0 = arith.constant 0 : i32
    return %arg0, %c0_i32 : i32, i32
  }
  func.func @transform_1(%arg0: i32, %arg1: i32) -> (i32, i32) {
    %c0_i32 = arith.constant 0 : i32
    %c0_i32_0 = arith.constant 0 : i32
    return %c0_i32, %arg1 : i32, i32
  }
  func.func @transform_2(%arg0: i32, %arg1: i32) -> (i32, i32) {
    %c0_i32 = arith.constant 0 : i32
    %c0_i32_0 = arith.constant 0 : i32
    return %c0_i32, %arg1 : i32, i32
  }
  func.func @transform_3(%arg0: i32, %arg1: i32) -> (i32, i32) {
    %c0_i32 = arith.constant 0 : i32
    return %arg0, %arg1 : i32, i32
  }
}

</mosaic_0001>

<llo_original>
// kernel: tpu_custom_call.1
$region0: #{tpu_custom_call.1}
  #allocation0 [shape = 'u32[]', space=smem, size = 0x4, offset = 0x4, fixed_abs, tag = 'smem constant byte address 0x4 - core index']
  #allocation1 [shape = 'u32[72,128]{1,0:T(1,128)}', space=vmem, size = 0x9000, scoped, tag = 'internal scratch']
  %s0 = inlined_call_operand.vmem [shape: bf16[8,32], index: 0, kind: input, shape index: {}]
  %s1 = inlined_call_operand.vmem [shape: bf16[32,16], index: 1, kind: input, shape index: {}]
  %s2 = inlined_call_operand.vmem [shape: f32[1,16], index: 2, kind: input, shape index: {}]
  %s3 = inlined_call_operand.hbm [shape: f32[8,16], index: 3, kind: output, shape index: {}]
  %s4 = sld [smem:[#allocation0]]
  $region22: #{tpu_custom_call.1} parent=0
    _
  %s6 = ssub.s32 1, %s4
  %s7 = scalar_select 0, %s6, %s4
  $region1: #{tpu_custom_call.1} parent=0
    #allocation2 [shape = 'u8[4096]{0}', space=vmem, size = 0x1000, scoped, tag = 'output window, operand 0, single buffered']
    #allocation3 [shape = 's32[1]{0}', space=sflag, size = 0x4, scoped, tag = 'scoped memory for tpu_custom_call.1']
    %8 = vsyncpa [#allocation3], 0
    // Predicated region
    $region2: #{tpu_custom_call.1} parent=1 // pred_check
      _
    $region3: #{tpu_custom_call.1} parent=1 // pred_check_branch
      %10 = sbr.rel (0) target = $region5
    $region4: #{tpu_custom_call.1} parent=1 // pred_region
      _
    $region5: #{tpu_custom_call.1} parent=1 // pred_fallthru
      _
    // Predicated region
    $region6: #{tpu_custom_call.1} parent=1 // pred_check
      _
    $region7: #{tpu_custom_call.1} parent=1 // pred_check_branch
      %12 = sbr.rel (0) target = $region9
    $region8: #{tpu_custom_call.1} parent=1 // pred_region
      _
    $region9: #{tpu_custom_call.1} parent=1 // pred_fallthru
      _
    // Predicated region
    $region10: #{tpu_custom_call.1} parent=1 // pred_check
      _
    $region11: #{tpu_custom_call.1} parent=1 // pred_check_branch
      %14 = sbr.rel (0) target = $region13
    $region12: #{tpu_custom_call.1} parent=1 // pred_region
      _
    $region13: #{tpu_custom_call.1} parent=1 // pred_fallthru
      _
    %v16 = vld [vmem:[%s0] sm:$0xf]
    %v17 = vld [vmem:[%s1] sm:$0xf]
    %v18 = vld [vmem:[%s1 + $0x4] sm:$0xf]
    %v19 = vld [vmem:[%s1 + $0x8] sm:$0xf]
    %v20 = vld [vmem:[%s1 + $0xc] sm:$0xf]
    %v25 = vunpack.c.l.b16 %v17
    %v26 = vunpack.c.l.b16 %v18
    %v27 = vunpack.c.l.b16 %v19
    %v28 = vunpack.c.l.b16 %v20
    %v29 = vpack.c.b16 %v26, %v25
    %v30 = vpack.c.b16 %v28, %v27
    %vm33 = vcmask 261120
    %v35 = vsel %vm33, %v16, 0
    %37 = vmatpush.bf16.msra.mxu0 0
    %38 = vmatpush.bf16.msra.mxu0 0
    %39 = vmatpush.bf16.msra.mxu0 0
    %40 = vmatpush.bf16.msra.mxu0 0
    %41 = vmatpush.bf16.msra.mxu0 0
    %42 = vmatpush.bf16.msra.mxu0 0
    %43 = vmatpush.bf16.msra.mxu0 %v30
    %44 = vmatpush.bf16.msra.mxu0 %v29
    %45 = vmatmul.bf16.gmra.mxu0 %v35
    %v46 = vpop.f32.mrf.mxu0
    %v47 = vadd.f32 0.0, %v46
    %v48 = vpop.f32.mrf.mxu0
    %49 = vdwg.mxu0
    %v50 = vld [vmem:[%s2] sm:$0x1]
    %v52 = vperm.slane %v50, 0
    %v54 = vmul.f32 %v47, %v52
    %v55 = vmax.f32 %v54, -1.0
    %v56 = vmin.f32 %v55, 1.0
    %vm57 = vcmask 130048
    %58 = vst.msk [vmem:[#allocation2] sm:$0xff] %vm57, %v56
    // Predicated region
    $region14: #{tpu_custom_call.1} parent=1 // pred_check
      _
    $region15: #{tpu_custom_call.1} parent=1 // pred_check_branch
      %60 = sbr.rel (0) target = $region17
    $region16: #{tpu_custom_call.1} parent=1 // pred_region
      %62 = vsyncadd [#allocation3], 0
      %s64 = sshll.u32 [#allocation2], 4
      %s65 = int_to_ptr.vmem [resolvable:$true] %s64
      %s66 = sshll.u32 %s3, 4
      %s67 = int_to_ptr.hbm [resolvable:$true] %s66
      %69 = dma.vmem_to_hbm [thread:$0]  %s65, 128, %s67, [#allocation3]
    $region17: #{tpu_custom_call.1} parent=1 // pred_fallthru
      _
    // Predicated region
    $region18: #{tpu_custom_call.1} parent=1 // pred_check
      _
    $region19: #{tpu_custom_call.1} parent=1 // pred_check_branch
      %71 = sbr.rel (0) target = $region21
    $region20: #{tpu_custom_call.1} parent=1 // pred_region
      %73 = dma.done [#allocation3], 128
    $region21: #{tpu_custom_call.1} parent=1 // pred_fallthru
      _
    %74 = vsyncpa [#allocation3], 1

</llo_original>
